<compile_context>
chip_gen: v6e
topology: v6e:2x2x1
jax: 0.10.0
libtpu: 0.0.40
codegen_flags: <defaults>
</compile_context>

<pallas_src>
import jax
import jax.numpy as jnp
from jax import lax
from jax.experimental import pallas as pl
from jax.experimental.pallas import tpu as pltpu


_EPS = 1e-12           # torch.nn.functional.normalize default eps
_EPS2 = _EPS * _EPS    # max(sqrt(s), eps) == sqrt(max(s, eps^2))


def _make_byol_partial_kernel(total_rows, needs_mask):
    """Kernel computing sum over this row-tile of cos(x_i, y_i)."""

    def kernel(x_ref, y_ref, o_ref):
        x = x_ref[...].astype(jnp.float32)
        y = y_ref[...].astype(jnp.float32)

        # Per-row reductions (VPU multiply + XLU lane-reduce), shape (tb, 1).
        xx = jnp.sum(x * x, axis=-1, keepdims=True)
        yy = jnp.sum(y * y, axis=-1, keepdims=True)
        xy = jnp.sum(x * y, axis=-1, keepdims=True)

        # cos = (x.y) / (max(||x||,eps) * max(||y||,eps))  via EUP rsqrt.
        inv = lax.rsqrt(jnp.maximum(xx, _EPS2)) * lax.rsqrt(jnp.maximum(yy, _EPS2))
        cos = xy * inv                                   # (tb, 1)

        if needs_mask:
            tb = cos.shape[0]
            rows = (pl.program_id(0) * tb
                    + lax.broadcasted_iota(jnp.int32, (tb, 1), 0))
            cos = jnp.where(rows < total_rows, cos, 0.0)

        # Lane-dense, (8,128)-aligned partial-sum block; wrapper reads [.,0,0].
        o_ref[...] = jnp.full(o_ref.shape, jnp.sum(cos), dtype=o_ref.dtype)

    return kernel


def byol_loss(x, y, *, block_rows=512):
    """Pallas TPU implementation of BYOL_loss.forward(x, y).

    x, y: (B, D) arrays. Returns a float32 scalar.
    """
    assert x.shape == y.shape and x.ndim == 2
    B, D = x.shape

    # Row-tile size: multiple of 8, capped so 2 inputs x 2 pipeline buffers of
    # f32 stay under ~8 MiB of VMEM on every generation.
    tb_cap = max(8, ((524288 // max(D, 1)) // 8) * 8)
    tb = min(block_rows, tb_cap)
    tb = max(8, (tb // 8) * 8)
    if B <= tb:
        tb = B  # full-dim block is always a legal tiling
    num_tiles = (B + tb - 1) // tb
    needs_mask = (B % tb) != 0

    kernel = _make_byol_partial_kernel(B, needs_mask)

    partials = pl.pallas_call(
        kernel,
        out_shape=jax.ShapeDtypeStruct((num_tiles, 8, 128), jnp.float32),
        grid=(num_tiles,),
        in_specs=[
            pl.BlockSpec((tb, D), lambda i: (i, 0)),
            pl.BlockSpec((tb, D), lambda i: (i, 0)),
        ],
        out_specs=pl.BlockSpec((1, 8, 128), lambda i: (i, 0, 0)),
        compiler_params=pltpu.CompilerParams(
            dimension_semantics=("parallel",)),
    )(x, y)

    # Finalize (cheap, O(num_tiles)): loss = mean(2 - 2*cos) = 2 - (2/B)*sum(cos)
    sum_cos = jnp.sum(partials[:, 0, 0])
    return (2.0 - (2.0 / B) * sum_cos).astype(jnp.float32)


def byol_loss_ref(x, y):
    """Pure-JAX reference mirroring the PyTorch module."""
    x = x.astype(jnp.float32)
    y = y.astype(jnp.float32)
    xn = x / jnp.maximum(jnp.linalg.norm(x, axis=1, keepdims=True), _EPS)
    yn = y / jnp.maximum(jnp.linalg.norm(y, axis=1, keepdims=True), _EPS)
    return jnp.mean(2.0 - 2.0 * jnp.sum(xn * yn, axis=-1))


if __name__ == "__main__":
    # Case 1: small single-tile path (B=8, D=32 projection-head embeddings).
    key = jax.random.PRNGKey(0)
    kx, ky = jax.random.split(key)
    B, D = 8, 32
    x = jax.random.normal(kx, (B, D), dtype=jnp.float32)
    y = jax.random.normal(ky, (B, D), dtype=jnp.float32)

    loss = byol_loss(x, y)
    jax.block_until_ready(loss)
    ref = byol_loss_ref(x, y)
    assert jnp.allclose(loss, ref, atol=1e-5, rtol=1e-5), (loss, ref)

    # Case 2: multi-tile path with a masked partial last tile (B=24, tb=16).
    kx2, ky2 = jax.random.split(jax.random.PRNGKey(1))
    B2, D2 = 24, 32
    x2 = jax.random.normal(kx2, (B2, D2), dtype=jnp.float32)
    y2 = jax.random.normal(ky2, (B2, D2), dtype=jnp.float32)

    loss2 = byol_loss(x2, y2, block_rows=16)
    jax.block_until_ready(loss2)
    ref2 = byol_loss_ref(x2, y2)
    assert jnp.allclose(loss2, ref2, atol=1e-5, rtol=1e-5), (loss2, ref2)

    print("KERNEL_OK")
</pallas_src>

<mosaic_0001>
module attributes {stable_mosaic.version = 11 : i64} {
  func.func @kernel(%arg0: i32, %arg1: memref<8x32xf32, #tpu.memory_space<vmem>>, %arg2: memref<8x32xf32, #tpu.memory_space<vmem>>, %arg3: memref<1x8x128xf32, #tpu.memory_space<vmem>>) attributes {dimension_semantics = [#tpu.dimension_semantics<parallel>], iteration_bounds = array<i64: 1>, scalar_prefetch = 0 : i64, scratch_operands = 0 : i64, tpu.core_type = #tpu.core_type<tc>, window_params = [{transform_indices = @transform_0, window_bounds = array<i64: 8, 32>}, {transform_indices = @transform_1, window_bounds = array<i64: 8, 32>}, {transform_indices = @transform_2, window_bounds = array<i64: 1, 8, 128>}]} {
    %c0 = arith.constant 0 : index
    %c0_0 = arith.constant 0 : index
    %0 = vector.load %arg1[%c0, %c0_0] : memref<8x32xf32, #tpu.memory_space<vmem>>, vector<8x32xf32>
    %c0_1 = arith.constant 0 : index
    %c0_2 = arith.constant 0 : index
    %1 = vector.load %arg2[%c0_1, %c0_2] : memref<8x32xf32, #tpu.memory_space<vmem>>, vector<8x32xf32>
    %2 = arith.mulf %0, %0 : vector<8x32xf32>
    %cst = arith.constant dense<0.000000e+00> : vector<8xf32>
    %3 = vector.multi_reduction <add>, %2, %cst [1] : vector<8x32xf32> to vector<8xf32>
    %4 = vector.shape_cast %3 : vector<8xf32> to vector<8x1xf32>
    %5 = arith.mulf %1, %1 : vector<8x32xf32>
    %cst_3 = arith.constant dense<0.000000e+00> : vector<8xf32>
    %6 = vector.multi_reduction <add>, %5, %cst_3 [1] : vector<8x32xf32> to vector<8xf32>
    %7 = vector.shape_cast %6 : vector<8xf32> to vector<8x1xf32>
    %8 = arith.mulf %0, %1 : vector<8x32xf32>
    %cst_4 = arith.constant dense<0.000000e+00> : vector<8xf32>
    %9 = vector.multi_reduction <add>, %8, %cst_4 [1] : vector<8x32xf32> to vector<8xf32>
    %10 = vector.shape_cast %9 : vector<8xf32> to vector<8x1xf32>
    %cst_5 = arith.constant 1.000000e-24 : f32
    %11 = vector.broadcast %cst_5 : f32 to vector<8x1xf32>
    %12 = arith.maximumf %4, %11 : vector<8x1xf32>
    %13 = math.rsqrt %12 : vector<8x1xf32>
    %cst_6 = arith.constant 1.000000e-24 : f32
    %14 = vector.broadcast %cst_6 : f32 to vector<8x1xf32>
    %15 = arith.maximumf %7, %14 : vector<8x1xf32>
    %16 = math.rsqrt %15 : vector<8x1xf32>
    %17 = arith.mulf %13, %16 : vector<8x1xf32>
    %18 = arith.mulf %10, %17 : vector<8x1xf32>
    %19 = vector.shape_cast %18 : vector<8x1xf32> to vector<1x8x1xf32>
    %cst_7 = arith.constant dense<0.000000e+00> : vector<1xf32>
    %20 = vector.multi_reduction <add>, %19, %cst_7 [1, 2] : vector<1x8x1xf32> to vector<1xf32>
    %21 = vector.shape_cast %20 : vector<1xf32> to vector<1x1x1xf32>
    %22 = vector.extract %21[0, 0, 0] : f32 from vector<1x1x1xf32>
    %23 = vector.broadcast %22 : f32 to vector<1x8x128xf32>
    %c0_8 = arith.constant 0 : index
    %c0_9 = arith.constant 0 : index
    %c0_10 = arith.constant 0 : index
    %24 = vector.load %arg3[%c0_8, %c0_9, %c0_10] : memref<1x8x128xf32, #tpu.memory_space<vmem>>, vector<1x8x128xf32>
    tpu.vector_store %arg3[%c0_8, %c0_9, %c0_10], %23 {strides = array<i32>} : memref<1x8x128xf32, #tpu.memory_space<vmem>>, vector<1x8x128xf32>,
    return
  }
  func.func @transform_0(%arg0: i32) -> (i32, i32) {
    %c0_i32 = arith.constant 0 : i32
    %c0_i32_0 = arith.constant 0 : i32
    return %arg0, %c0_i32 : i32, i32
  }
  func.func @transform_1(%arg0: i32) -> (i32, i32) {
    %c0_i32 = arith.constant 0 : i32
    %c0_i32_0 = arith.constant 0 : i32
    return %arg0, %c0_i32 : i32, i32
  }
  func.func @transform_2(%arg0: i32) -> (i32, i32, i32) {
    %c0_i32 = arith.constant 0 : i32
    %c0_i32_0 = arith.constant 0 : i32
    %c0_i32_1 = arith.constant 0 : i32
    return %arg0, %c0_i32, %c0_i32_0 : i32, i32, i32
  }
}

</mosaic_0001>

<llo_original>
// kernel: tpu_custom_call.1
$region0: #{tpu_custom_call.1}
  #allocation0 [shape = 'u32[]', space=smem, size = 0x4, offset = 0x4, fixed_abs, tag = 'smem constant byte address 0x4 - core index']
  #allocation1 [shape = 'u32[144,128]{1,0:T(1,128)}', space=vmem, size = 0x12000, scoped, tag = 'internal scratch']
  %s0 = inlined_call_operand.hbm [shape: f32[8,32], index: 0, kind: input, shape index: {}]
  %s1 = inlined_call_operand.hbm [shape: f32[8,32], index: 1, kind: input, shape index: {}]
  %s2 = inlined_call_operand.hbm [shape: f32[1,8,128], index: 2, kind: output, shape index: {}]
  %s3 = sld [smem:[#allocation0]]
  $region26: #{tpu_custom_call.1} parent=0
    _
  %s5 = ssub.s32 1, %s3
  %s6 = scalar_select 0, %s5, %s3
  $region1: #{tpu_custom_call.1} parent=0
    #allocation2 [shape = 'u8[4096]{0}', space=vmem, size = 0x1000, scoped, tag = 'input window, operand 0, single buffered']
    #allocation3 [shape = 's32[1]{0}', space=sflag, size = 0x4, scoped, tag = 'scoped memory for tpu_custom_call.1']
    #allocation4 [shape = 's32[1]{0}', space=sflag, size = 0x4, scoped, tag = 'scoped memory for tpu_custom_call.1']
    #allocation5 [shape = 'u8[4096]{0}', space=vmem, size = 0x1000, scoped, tag = 'input window, operand 1, single buffered']
    #allocation6 [shape = 's32[1]{0}', space=sflag, size = 0x4, scoped, tag = 'scoped memory for tpu_custom_call.1']
    #allocation7 [shape = 'u8[4096]{0}', space=vmem, size = 0x1000, scoped, tag = 'output window, operand 0, single buffered']
    %7 = vsyncpa [#allocation3], 0
    %8 = vsyncpa [#allocation6], 0
    %9 = vsyncpa [#allocation4], 0
    // Predicated region
    $region2: #{tpu_custom_call.1} parent=1 // pred_check
      _
    $region3: #{tpu_custom_call.1} parent=1 // pred_check_branch
      %11 = sbr.rel (0) target = $region5
    $region4: #{tpu_custom_call.1} parent=1 // pred_region
      %s13 = ssub.s32 128, 128
      %14 = vsyncadd [#allocation3], %s13
      %s16 = sshll.u32 [#allocation2], 4
      %s17 = int_to_ptr.vmem [resolvable:$true] %s16
      %19 = dma.hbm_to_vmem [thread:$0]  %s0, 128, %s17, [#allocation3]
    $region5: #{tpu_custom_call.1} parent=1 // pred_fallthru
      _
    // Predicated region
    $region6: #{tpu_custom_call.1} parent=1 // pred_check
      _
    $region7: #{tpu_custom_call.1} parent=1 // pred_check_branch
      %21 = sbr.rel (0) target = $region9
    $region8: #{tpu_custom_call.1} parent=1 // pred_region
      %s23 = ssub.s32 128, 128
      %24 = vsyncadd [#allocation6], %s23
      %s26 = sshll.u32 [#allocation5], 4
      %s27 = int_to_ptr.vmem [resolvable:$true] %s26
      %29 = dma.hbm_to_vmem [thread:$0]  %s1, 128, %s27, [#allocation6]
    $region9: #{tpu_custom_call.1} parent=1 // pred_fallthru
      _
    // Predicated region
    $region10: #{tpu_custom_call.1} parent=1 // pred_check
      _
    $region11: #{tpu_custom_call.1} parent=1 // pred_check_branch
      %31 = sbr.rel (0) target = $region13
    $region12: #{tpu_custom_call.1} parent=1 // pred_region
      %32 = dma.done [#allocation3], 128
    $region13: #{tpu_custom_call.1} parent=1 // pred_fallthru
      _
    // Predicated region
    $region14: #{tpu_custom_call.1} parent=1 // pred_check
      _
    $region15: #{tpu_custom_call.1} parent=1 // pred_check_branch
      %34 = sbr.rel (0) target = $region17
    $region16: #{tpu_custom_call.1} parent=1 // pred_region
      %35 = dma.done [#allocation6], 128
    $region17: #{tpu_custom_call.1} parent=1 // pred_fallthru
      _
    %v36 = vld [vmem:[#allocation2] sm:$0xff]
    %v37 = vld [vmem:[#allocation5] sm:$0xff]
    %v38 = vmul.f32 %v36, %v36
    %vm39 = vcmask 261120
    %v40 = vsel %vm39, %v38, 0.0
    %41 = vadd.xlane.f32.xlu0 %v40
    %v42 = vpop.xlane.xlu0 %41
    %v43 = vmul.f32 %v37, %v37
    %v44 = vsel %vm39, %v43, 0.0
    %45 = vadd.xlane.f32.xlu0 %v44
    %v46 = vpop.xlane.xlu0 %45
    %v47 = vmul.f32 %v36, %v37
    %v48 = vsel %vm39, %v47, 0.0
    %49 = vadd.xlane.f32.xlu0 %v48
    %v50 = vpop.xlane.xlu0 %49
    %v51 = vmax.f32 %v42, 1e-24
    %v52 = vrsqrt.pop %v51
    %v53 = vmax.f32 %v46, 1e-24
    %v54 = vrsqrt.pop %v53
    %v55 = vmul.f32 %v52, %v54
    %v56 = vmul.f32 %v50, %v55
    %vm57 = vcmask 7168
    %v58 = vsel %vm57, %v56, 0.0
    %59 = vadd.xlane.f32.xlu0 %v58
    %v60 = vpop.xlane.xlu0 %59
    %v61 = vrot.slane %v60, 4
    %v62 = vadd.f32 %v60, %v61
    %v63 = vrot.slane %v62, 2
    %v64 = vadd.f32 %v62, %v63
    %v65 = vrot.slane %v64, 1
    %v66 = vadd.f32 %v64, %v65
    %s67 = vtos %v66
    %v68 = vstv %s67
    %69 = vst [vmem:[#allocation7] sm:$0xff] %v68
    // Predicated region
    $region18: #{tpu_custom_call.1} parent=1 // pred_check
      _
    $region19: #{tpu_custom_call.1} parent=1 // pred_check_branch
      %71 = sbr.rel (0) target = $region21
    $region20: #{tpu_custom_call.1} parent=1 // pred_region
      %s73 = ssub.s32 128, 128
      %74 = vsyncadd [#allocation4], %s73
      %s76 = sshll.u32 [#allocation7], 4
      %s77 = int_to_ptr.vmem [resolvable:$true] %s76
      %79 = dma.vmem_to_hbm [thread:$0]  %s77, 128, %s2, [#allocation4]
    $region21: #{tpu_custom_call.1} parent=1 // pred_fallthru
      _
    // Predicated region
    $region22: #{tpu_custom_call.1} parent=1 // pred_check
      _
    $region23: #{tpu_custom_call.1} parent=1 // pred_check_branch
      %81 = sbr.rel (0) target = $region25
    $region24: #{tpu_custom_call.1} parent=1 // pred_region
      %82 = dma.done [#allocation4], 128
    $region25: #{tpu_custom_call.1} parent=1 // pred_fallthru
      _
    %83 = vsyncpa [#allocation3], 1
    %84 = vsyncpa [#allocation6], 1
    %85 = vsyncpa [#allocation4], 1

</llo_original>
